<compile_context>
chip_gen: v5e
topology: v5e:2x2
jax: 0.10.0
libtpu: 0.0.40
codegen_flags: <defaults>
</compile_context>

<pallas_src>
import functools

import jax
import jax.numpy as jnp
from jax import lax
from jax.experimental import pallas as pl
from jax.experimental.pallas import tpu as pltpu


# ---------------------------------------------------------------------------
# Kernel
# ---------------------------------------------------------------------------
def _fused_heads_kernel(l_id, l_type,
                        xi_ref, xt_ref,
                        w1i_ref, b1i_ref, w2i_ref, b2i_ref,
                        w1t_ref, b1t_ref, w2t_ref, b2t_ref,
                        pid_ref, pty_ref):
    """Both classification heads + masked softmax on one batch tile.

    xi_ref / xt_ref : (TB, H)   gathered class tokens (MXU dtype), streamed
    w1*_ref         : (H, H)    dense weight, pre-transposed to [in, out]
    b1*_ref         : (1, H)    dense bias (elementwise dtype)
    w2*_ref         : (H, Lp)   out_proj weight, [in, out], labels padded to 128
    b2*_ref         : (1, Lp)   out_proj bias (f32, padded with zeros)
    pid_ref/pty_ref : (TB, Lp)  softmax probabilities (f32)
    """

    def one_head(x_ref, w1_ref, b1_ref, w2_ref, b2_ref, n_valid, o_ref):
        # dropout -> identity at inference
        h = jnp.dot(x_ref[...], w1_ref[...],
                    preferred_element_type=jnp.float32)          # MXU, f32 acc
        h = jnp.tanh(h.astype(b1_ref.dtype) + b1_ref[...])       # VPU + EUP
        # dropout -> identity at inference
        y = jnp.dot(h.astype(w2_ref.dtype), w2_ref[...],
                    preferred_element_type=jnp.float32)          # MXU, f32 acc
        logits = y + b2_ref[...]                                  # f32
        # Masked softmax: padded label columns must not reach the denominator.
        if n_valid != logits.shape[-1]:
            cols = lax.broadcasted_iota(jnp.int32, logits.shape, 1)
            logits = jnp.where(cols < n_valid, logits, jnp.float32(-1e30))
        m = jnp.max(logits, axis=-1, keepdims=True)
        e = jnp.exp(logits - m)
        o_ref[...] = (e / jnp.sum(e, axis=-1, keepdims=True)).astype(o_ref.dtype)

    one_head(xi_ref, w1i_ref, b1i_ref, w2i_ref, b2i_ref, l_id, pid_ref)
    one_head(xt_ref, w1t_ref, b1t_ref, w2t_ref, b2t_ref, l_type, pty_ref)
    # TODO(synk): training-mode dropout (hidden_dropout_prob) and the
    # CrossEntropyLoss branch are not implemented; eval-mode forward only.


# ---------------------------------------------------------------------------
# One-time weight preparation (hoisted out of the per-inference call)
# ---------------------------------------------------------------------------
def prepare_head_params(dense_w, dense_b, out_w, out_b, *,
                        mxu_dtype=None, elementwise_dtype=None):
    """Pre-transpose / pad / cast one RobertaClassificationHead's parameters.

    dense_w: [H, H], dense_b: [H]   (PyTorch [out, in] layout)
    out_w:   [L, H], out_b:   [L]
    mxu_dtype:        optional narrower MXU operand dtype (e.g. jnp.bfloat16).
    elementwise_dtype: dtype for the bias-add + tanh; defaults to mxu_dtype
                       (pass jnp.float32 on v5e, which has no bf16 VPU/EUP).
    """
    mdt = jnp.float32 if mxu_dtype is None else mxu_dtype
    ewdt = mdt if elementwise_dtype is None else elementwise_dtype
    L = out_w.shape[0]
    Lp = pl.cdiv(L, 128) * 128                                   # lane-dense
    w1 = jnp.asarray(dense_w).T.astype(mdt)                      # [H_in, H_out]
    b1 = jnp.asarray(dense_b).astype(ewdt)[None, :]              # [1, H]
    w2 = jnp.pad(jnp.asarray(out_w),
                 ((0, Lp - L), (0, 0))).T.astype(mdt)            # [H, Lp]
    b2 = jnp.pad(jnp.asarray(out_b).astype(jnp.float32),
                 (0, Lp - L))[None, :]                           # [1, Lp]
    return dict(w1=w1, b1=b1, w2=w2, b2=b2, num_labels=L)


# ---------------------------------------------------------------------------
# MOBERT inference branch (both heads + softmax) given the encoder output
# ---------------------------------------------------------------------------
def mobert_cls_probs(encoder_last_hidden_state, input_ids, pad_token_id,
                     id_params, type_params, *,
                     batch_tile=512, min_grid_steps=2):
    """MOBERT.forward inference branch: returns (cwe_id_prob, cwe_type_prob).

    encoder_last_hidden_state: [B, S, H] encoder hidden states.
    input_ids:                 [B, S] token ids (for the type-head token loc).
    id_params / type_params:   outputs of prepare_head_params.
    """
    # TODO(synk): the RoBERTa encoder (self.roberta) is an external pretrained
    # transformer and is not re-implemented here.
    B, S, H = encoder_last_hidden_state.shape
    mdt = id_params["w1"].dtype
    L_id, L_ty = id_params["num_labels"], type_params["num_labels"]
    Lp_id, Lp_ty = id_params["w2"].shape[1], type_params["w2"].shape[1]

    # Gather the per-head classification tokens OUTSIDE the kernel so the
    # kernel never streams the (S, H) slab it would immediately discard.
    x_id = encoder_last_hidden_state[:, 0, :]
    loc = jnp.sum((input_ids != pad_token_id).astype(jnp.int32), axis=-1) - 2
    loc = jnp.clip(loc, 0, S - 1)                       # guard degenerate inputs
    x_type = jnp.take_along_axis(encoder_last_hidden_state,
                                 loc[:, None, None], axis=1)[:, 0, :]
    # Cast the streamed operands once in the wrapper (halves HBM bytes in bf16).
    x_id = x_id.astype(mdt)
    x_type = x_type.astype(mdt)

    # Batch tiling: >= min_grid_steps grid steps (v7x megacore split), even
    # work per step, TB a multiple of 8 for sublane alignment.
    n_steps = max(pl.cdiv(B, batch_tile), min_grid_steps)
    TB = max(8, ((pl.cdiv(B, n_steps) + 7) // 8) * 8)
    Bp = n_steps * TB
    if Bp != B:
        pad = ((0, Bp - B), (0, 0))
        x_id = jnp.pad(x_id, pad)
        x_type = jnp.pad(x_type, pad)

    # Whole-array VMEM residency (single-buffered, not pipelined) for the
    # weights/biases whose block index never advances.
    resident = pl.BlockSpec(memory_space=pltpu.MemorySpace.VMEM)
    x_spec = pl.BlockSpec((TB, H), lambda i: (i, 0))

    grid_spec = pltpu.PrefetchScalarGridSpec(
        num_scalar_prefetch=0,
        grid=(n_steps,),
        in_specs=[
            x_spec, x_spec,                              # streamed class tokens
            resident, resident, resident, resident,      # id head params
            resident, resident, resident, resident,      # type head params
        ],
        out_specs=(
            pl.BlockSpec((TB, Lp_id), lambda i: (i, 0)),
            pl.BlockSpec((TB, Lp_ty), lambda i: (i, 0)),
        ),
    )

    id_prob, ty_prob = pl.pallas_call(
        functools.partial(_fused_heads_kernel, L_id, L_ty),
        out_shape=(jax.ShapeDtypeStruct((Bp, Lp_id), jnp.float32),
                   jax.ShapeDtypeStruct((Bp, Lp_ty), jnp.float32)),
        grid_spec=grid_spec,
        compiler_params=pltpu.CompilerParams(
            dimension_semantics=("parallel",)),          # megacore split on v7x
    )(x_id, x_type,
      id_params["w1"], id_params["b1"], id_params["w2"], id_params["b2"],
      type_params["w1"], type_params["b1"], type_params["w2"], type_params["b2"])

    return id_prob[:B, :L_id], ty_prob[:B, :L_ty]


# ---------------------------------------------------------------------------
# Pure-JAX reference (eval-mode RobertaClassificationHead + softmax)
# ---------------------------------------------------------------------------
def _ref_head_logits(features, loc, dw, db, ow, ob):
    if isinstance(loc, int):
        x = features[:, loc, :]
    else:
        x = features[jnp.arange(features.shape[0]), loc, :]
    h = jnp.tanh(x @ dw.T + db)
    return h @ ow.T + ob


if __name__ == "__main__":
    # Small config: batch=2, seq=8, hidden=32, num_cwe_id=5, num_cwe_types=3
    B, S, H = 2, 8, 32
    L_ID, L_TYPE = 5, 3
    PAD_ID = 1

    key = jax.random.PRNGKey(0)
    keys = jax.random.split(key, 9)

    features = jax.random.normal(keys[0], (B, S, H), dtype=jnp.float32)
    lengths = jnp.array([8, 5], dtype=jnp.int32)
    input_ids = jnp.where(jnp.arange(S)[None, :] < lengths[:, None],
                          jnp.int32(100), jnp.int32(PAD_ID))

    def linear_params(kw, kb, out_dim, in_dim):
        w = jax.random.normal(kw, (out_dim, in_dim), dtype=jnp.float32) * 0.05
        b = jax.random.normal(kb, (out_dim,), dtype=jnp.float32) * 0.05
        return w, b

    id_dw, id_db = linear_params(keys[1], keys[2], H, H)
    id_ow, id_ob = linear_params(keys[3], keys[4], L_ID, H)
    ty_dw, ty_db = linear_params(keys[5], keys[6], H, H)
    ty_ow, ty_ob = linear_params(keys[7], keys[8], L_TYPE, H)

    # Reference probabilities (pure JAX, eval-mode head + softmax).
    type_locs = jnp.clip(
        jnp.sum((input_ids != PAD_ID).astype(jnp.int32), axis=-1) - 2, 0, S - 1)
    id_ref = jax.nn.softmax(
        _ref_head_logits(features, 0, id_dw, id_db, id_ow, id_ob), axis=-1)
    ty_ref = jax.nn.softmax(
        _ref_head_logits(features, type_locs, ty_dw, ty_db, ty_ow, ty_ob), axis=-1)

    # --- f32 path: matches the pure-JAX reference closely --------------------
    id_p32 = prepare_head_params(id_dw, id_db, id_ow, id_ob)
    ty_p32 = prepare_head_params(ty_dw, ty_db, ty_ow, ty_ob)
    id_prob, ty_prob = mobert_cls_probs(
        features, input_ids, PAD_ID, id_p32, ty_p32)
    id_prob, ty_prob = jax.block_until_ready((id_prob, ty_prob))
    assert id_prob.shape == (B, L_ID) and ty_prob.shape == (B, L_TYPE)
    assert jnp.allclose(id_prob, id_ref, atol=3e-5, rtol=1e-4)
    assert jnp.allclose(ty_prob, ty_ref, atol=3e-5, rtol=1e-4)
    # Probabilities over the real labels sum to 1 (padded columns masked out).
    assert jnp.allclose(jnp.sum(id_prob, -1), 1.0, atol=1e-5)
    assert jnp.allclose(jnp.sum(ty_prob, -1), 1.0, atol=1e-5)

    # --- bf16 MXU + bf16 elementwise (v6e/v7x configuration) ----------------
    id_pbf = prepare_head_params(id_dw, id_db, id_ow, id_ob,
                                 mxu_dtype=jnp.bfloat16)
    ty_pbf = prepare_head_params(ty_dw, ty_db, ty_ow, ty_ob,
                                 mxu_dtype=jnp.bfloat16)
    id_prob_b, ty_prob_b = mobert_cls_probs(
        features, input_ids, PAD_ID, id_pbf, ty_pbf)
    id_prob_b, ty_prob_b = jax.block_until_ready((id_prob_b, ty_prob_b))
    assert jnp.allclose(id_prob_b, id_ref, atol=1e-2, rtol=5e-2)
    assert jnp.allclose(ty_prob_b, ty_ref, atol=1e-2, rtol=5e-2)

    print("KERNEL_OK")
</pallas_src>

<mosaic_0001>
module attributes {stable_mosaic.version = 11 : i64} {
  func.func @_fused_heads_kernel(%arg0: i32, %arg1: memref<8x32xf32, #tpu.memory_space<vmem>>, %arg2: memref<8x32xf32, #tpu.memory_space<vmem>>, %arg3: memref<32x32xf32, #tpu.memory_space<vmem>>, %arg4: memref<1x32xf32, #tpu.memory_space<vmem>>, %arg5: memref<32x128xf32, #tpu.memory_space<vmem>>, %arg6: memref<1x128xf32, #tpu.memory_space<vmem>>, %arg7: memref<32x32xf32, #tpu.memory_space<vmem>>, %arg8: memref<1x32xf32, #tpu.memory_space<vmem>>, %arg9: memref<32x128xf32, #tpu.memory_space<vmem>>, %arg10: memref<1x128xf32, #tpu.memory_space<vmem>>, %arg11: memref<8x128xf32, #tpu.memory_space<vmem>>, %arg12: memref<8x128xf32, #tpu.memory_space<vmem>>) attributes {dimension_semantics = [#tpu.dimension_semantics<parallel>], iteration_bounds = array<i64: 2>, scalar_prefetch = 0 : i64, scratch_operands = 0 : i64, tpu.core_type = #tpu.core_type<tc>, window_params = [{transform_indices = @transform_0, window_bounds = array<i64: 8, 32>}, {transform_indices = @transform_1, window_bounds = array<i64: 8, 32>}, {pipeline_mode = #tpu.pipeline_mode<synchronous>, transform_indices = @transform_2, window_bounds = array<i64: 32, 32>}, {pipeline_mode = #tpu.pipeline_mode<synchronous>, transform_indices = @transform_3, window_bounds = array<i64: 1, 32>}, {pipeline_mode = #tpu.pipeline_mode<synchronous>, transform_indices = @transform_4, window_bounds = array<i64: 32, 128>}, {pipeline_mode = #tpu.pipeline_mode<synchronous>, transform_indices = @transform_5, window_bounds = array<i64: 1, 128>}, {pipeline_mode = #tpu.pipeline_mode<synchronous>, transform_indices = @transform_6, window_bounds = array<i64: 32, 32>}, {pipeline_mode = #tpu.pipeline_mode<synchronous>, transform_indices = @transform_7, window_bounds = array<i64: 1, 32>}, {pipeline_mode = #tpu.pipeline_mode<synchronous>, transform_indices = @transform_8, window_bounds = array<i64: 32, 128>}, {pipeline_mode = #tpu.pipeline_mode<synchronous>, transform_indices = @transform_9, window_bounds = array<i64: 1, 128>}, {transform_indices = @transform_10, window_bounds = array<i64: 8, 128>}, {transform_indices = @transform_11, window_bounds = array<i64: 8, 128>}]} {
    %c0 = arith.constant 0 : index
    %c0_0 = arith.constant 0 : index
    %0 = vector.load %arg1[%c0, %c0_0] : memref<8x32xf32, #tpu.memory_space<vmem>>, vector<8x32xf32>
    %c0_1 = arith.constant 0 : index
    %c0_2 = arith.constant 0 : index
    %1 = vector.load %arg3[%c0_1, %c0_2] : memref<32x32xf32, #tpu.memory_space<vmem>>, vector<32x32xf32>
    %cst = arith.constant dense<0.000000e+00> : vector<8x32xf32>
    %2 = tpu.matmul %0, %1, %cst {dimension_numbers = #tpu.dot_dimension_numbers<[1], [0], [0], [1], [0, 0, 1, 1], [], []>} : vector<8x32xf32>, vector<32x32xf32>, vector<8x32xf32> -> vector<8x32xf32>
    %c0_3 = arith.constant 0 : index
    %c0_4 = arith.constant 0 : index
    %3 = vector.load %arg4[%c0_3, %c0_4] : memref<1x32xf32, #tpu.memory_space<vmem>>, vector<1x32xf32>
    %4 = vector.broadcast %3 : vector<1x32xf32> to vector<8x32xf32>
    %5 = arith.addf %2, %4 : vector<8x32xf32>
    %6 = math.tanh %5 : vector<8x32xf32>
    %c0_5 = arith.constant 0 : index
    %c0_6 = arith.constant 0 : index
    %7 = vector.load %arg5[%c0_5, %c0_6] : memref<32x128xf32, #tpu.memory_space<vmem>>, vector<32x128xf32>
    %cst_7 = arith.constant dense<0.000000e+00> : vector<8x128xf32>
    %8 = tpu.matmul %6, %7, %cst_7 {dimension_numbers = #tpu.dot_dimension_numbers<[1], [0], [0], [1], [0, 0, 1, 1], [], []>} : vector<8x32xf32>, vector<32x128xf32>, vector<8x128xf32> -> vector<8x128xf32>
    %c0_8 = arith.constant 0 : index
    %c0_9 = arith.constant 0 : index
    %9 = vector.load %arg6[%c0_8, %c0_9] : memref<1x128xf32, #tpu.memory_space<vmem>>, vector<1x128xf32>
    %10 = vector.broadcast %9 : vector<1x128xf32> to vector<8x128xf32>
    %11 = arith.addf %8, %10 : vector<8x128xf32>
    %12 = tpu.iota {dimensions = array<i32: 1>} : vector<8x128xi32>
    %c5_i32 = arith.constant 5 : i32
    %13 = vector.broadcast %c5_i32 : i32 to vector<8x128xi32>
    %14 = arith.cmpi slt, %12, %13 : vector<8x128xi32>
    %cst_10 = arith.constant -1.000000e+30 : f32
    %15 = vector.broadcast %cst_10 : f32 to vector<8x128xf32>
    %16 = arith.select %14, %11, %15 : vector<8x128xi1>, vector<8x128xf32>
    %cst_11 = arith.constant dense<0xFF800000> : vector<8xf32>
    %17 = vector.multi_reduction <maximumf>, %16, %cst_11 [1] : vector<8x128xf32> to vector<8xf32>
    %18 = vector.shape_cast %17 : vector<8xf32> to vector<8x1xf32>
    %19 = vector.broadcast %18 : vector<8x1xf32> to vector<8x128xf32>
    %20 = arith.subf %16, %19 : vector<8x128xf32>
    %21 = math.exp %20 : vector<8x128xf32>
    %cst_12 = arith.constant dense<0.000000e+00> : vector<8xf32>
    %22 = vector.multi_reduction <add>, %21, %cst_12 [1] : vector<8x128xf32> to vector<8xf32>
    %23 = vector.shape_cast %22 : vector<8xf32> to vector<8x1xf32>
    %24 = vector.broadcast %23 : vector<8x1xf32> to vector<8x128xf32>
    %25 = arith.divf %21, %24 : vector<8x128xf32>
    %c0_13 = arith.constant 0 : index
    %c0_14 = arith.constant 0 : index
    %26 = vector.load %arg11[%c0_13, %c0_14] : memref<8x128xf32, #tpu.memory_space<vmem>>, vector<8x128xf32>
    tpu.vector_store %arg11[%c0_13, %c0_14], %25 {strides = array<i32>} : memref<8x128xf32, #tpu.memory_space<vmem>>, vector<8x128xf32>,
    %c0_15 = arith.constant 0 : index
    %c0_16 = arith.constant 0 : index
    %27 = vector.load %arg2[%c0_15, %c0_16] : memref<8x32xf32, #tpu.memory_space<vmem>>, vector<8x32xf32>
    %c0_17 = arith.constant 0 : index
    %c0_18 = arith.constant 0 : index
    %28 = vector.load %arg7[%c0_17, %c0_18] : memref<32x32xf32, #tpu.memory_space<vmem>>, vector<32x32xf32>
    %cst_19 = arith.constant dense<0.000000e+00> : vector<8x32xf32>
    %29 = tpu.matmul %27, %28, %cst_19 {dimension_numbers = #tpu.dot_dimension_numbers<[1], [0], [0], [1], [0, 0, 1, 1], [], []>} : vector<8x32xf32>, vector<32x32xf32>, vector<8x32xf32> -> vector<8x32xf32>
    %c0_20 = arith.constant 0 : index
    %c0_21 = arith.constant 0 : index
    %30 = vector.load %arg8[%c0_20, %c0_21] : memref<1x32xf32, #tpu.memory_space<vmem>>, vector<1x32xf32>
    %31 = vector.broadcast %30 : vector<1x32xf32> to vector<8x32xf32>
    %32 = arith.addf %29, %31 : vector<8x32xf32>
    %33 = math.tanh %32 : vector<8x32xf32>
    %c0_22 = arith.constant 0 : index
    %c0_23 = arith.constant 0 : index
    %34 = vector.load %arg9[%c0_22, %c0_23] : memref<32x128xf32, #tpu.memory_space<vmem>>, vector<32x128xf32>
    %cst_24 = arith.constant dense<0.000000e+00> : vector<8x128xf32>
    %35 = tpu.matmul %33, %34, %cst_24 {dimension_numbers = #tpu.dot_dimension_numbers<[1], [0], [0], [1], [0, 0, 1, 1], [], []>} : vector<8x32xf32>, vector<32x128xf32>, vector<8x128xf32> -> vector<8x128xf32>
    %c0_25 = arith.constant 0 : index
    %c0_26 = arith.constant 0 : index
    %36 = vector.load %arg10[%c0_25, %c0_26] : memref<1x128xf32, #tpu.memory_space<vmem>>, vector<1x128xf32>
    %37 = vector.broadcast %36 : vector<1x128xf32> to vector<8x128xf32>
    %38 = arith.addf %35, %37 : vector<8x128xf32>
    %39 = tpu.iota {dimensions = array<i32: 1>} : vector<8x128xi32>
    %c3_i32 = arith.constant 3 : i32
    %40 = vector.broadcast %c3_i32 : i32 to vector<8x128xi32>
    %41 = arith.cmpi slt, %39, %40 : vector<8x128xi32>
    %cst_27 = arith.constant -1.000000e+30 : f32
    %42 = vector.broadcast %cst_27 : f32 to vector<8x128xf32>
    %43 = arith.select %41, %38, %42 : vector<8x128xi1>, vector<8x128xf32>
    %cst_28 = arith.constant dense<0xFF800000> : vector<8xf32>
    %44 = vector.multi_reduction <maximumf>, %43, %cst_28 [1] : vector<8x128xf32> to vector<8xf32>
    %45 = vector.shape_cast %44 : vector<8xf32> to vector<8x1xf32>
    %46 = vector.broadcast %45 : vector<8x1xf32> to vector<8x128xf32>
    %47 = arith.subf %43, %46 : vector<8x128xf32>
    %48 = math.exp %47 : vector<8x128xf32>
    %cst_29 = arith.constant dense<0.000000e+00> : vector<8xf32>
    %49 = vector.multi_reduction <add>, %48, %cst_29 [1] : vector<8x128xf32> to vector<8xf32>
    %50 = vector.shape_cast %49 : vector<8xf32> to vector<8x1xf32>
    %51 = vector.broadcast %50 : vector<8x1xf32> to vector<8x128xf32>
    %52 = arith.divf %48, %51 : vector<8x128xf32>
    %c0_30 = arith.constant 0 : index
    %c0_31 = arith.constant 0 : index
    %53 = vector.load %arg12[%c0_30, %c0_31] : memref<8x128xf32, #tpu.memory_space<vmem>>, vector<8x128xf32>
    tpu.vector_store %arg12[%c0_30, %c0_31], %52 {strides = array<i32>} : memref<8x128xf32, #tpu.memory_space<vmem>>, vector<8x128xf32>,
    return
  }
  func.func @transform_0(%arg0: i32) -> (i32, i32) {
    %c0_i32 = arith.constant 0 : i32
    %c0_i32_0 = arith.constant 0 : i32
    return %arg0, %c0_i32 : i32, i32
  }
  func.func @transform_1(%arg0: i32) -> (i32, i32) {
    %c0_i32 = arith.constant 0 : i32
    %c0_i32_0 = arith.constant 0 : i32
    return %arg0, %c0_i32 : i32, i32
  }
  func.func @transform_2(%arg0: i32) -> (i32, i32) {
    %c0_i32 = arith.constant 0 : i32
    %c0_i32_0 = arith.constant 0 : i32
    %c0_i32_1 = arith.constant 0 : i32
    return %c0_i32, %c0_i32_0 : i32, i32
  }
  func.func @transform_3(%arg0: i32) -> (i32, i32) {
    %c0_i32 = arith.constant 0 : i32
    %c0_i32_0 = arith.constant 0 : i32
    %c0_i32_1 = arith.constant 0 : i32
    return %c0_i32, %c0_i32_0 : i32, i32
  }
  func.func @transform_4(%arg0: i32) -> (i32, i32) {
    %c0_i32 = arith.constant 0 : i32
    %c0_i32_0 = arith.constant 0 : i32
    %c0_i32_1 = arith.constant 0 : i32
    return %c0_i32, %c0_i32_0 : i32, i32
  }
  func.func @transform_5(%arg0: i32) -> (i32, i32) {
    %c0_i32 = arith.constant 0 : i32
    %c0_i32_0 = arith.constant 0 : i32
    %c0_i32_1 = arith.constant 0 : i32
    return %c0_i32, %c0_i32_0 : i32, i32
  }
  func.func @transform_6(%arg0: i32) -> (i32, i32) {
    %c0_i32 = arith.constant 0 : i32
    %c0_i32_0 = arith.constant 0 : i32
    %c0_i32_1 = arith.constant 0 : i32
    return %c0_i32, %c0_i32_0 : i32, i32
  }
  func.func @transform_7(%arg0: i32) -> (i32, i32) {
    %c0_i32 = arith.constant 0 : i32
    %c0_i32_0 = arith.constant 0 : i32
    %c0_i32_1 = arith.constant 0 : i32
    return %c0_i32, %c0_i32_0 : i32, i32
  }
  func.func @transform_8(%arg0: i32) -> (i32, i32) {
    %c0_i32 = arith.constant 0 : i32
    %c0_i32_0 = arith.constant 0 : i32
    %c0_i32_1 = arith.constant 0 : i32
    return %c0_i32, %c0_i32_0 : i32, i32
  }
  func.func @transform_9(%arg0: i32) -> (i32, i32) {
    %c0_i32 = arith.constant 0 : i32
    %c0_i32_0 = arith.constant 0 : i32
    %c0_i32_1 = arith.constant 0 : i32
    return %c0_i32, %c0_i32_0 : i32, i32
  }
  func.func @transform_10(%arg0: i32) -> (i32, i32) {
    %c0_i32 = arith.constant 0 : i32
    %c0_i32_0 = arith.constant 0 : i32
    return %arg0, %c0_i32 : i32, i32
  }
  func.func @transform_11(%arg0: i32) -> (i32, i32) {
    %c0_i32 = arith.constant 0 : i32
    %c0_i32_0 = arith.constant 0 : i32
    return %arg0, %c0_i32 : i32, i32
  }
}

</mosaic_0001>

<llo_original>
// kernel: tpu_custom_call.1
$region0: #{tpu_custom_call.1}
  #allocation0 [shape = 'u32[]', space=smem, size = 0x4, offset = 0x4, fixed_abs, tag = 'smem constant byte address 0x4 - core index']
  #allocation1 [shape = 'u32[72,128]{1,0:T(1,128)}', space=vmem, size = 0x9000, scoped, tag = 'internal scratch']
  %s0 = inlined_call_operand.hbm [shape: f32[16,32], index: 0, kind: input, shape index: {}]
  %s1 = inlined_call_operand.hbm [shape: f32[16,32], index: 1, kind: input, shape index: {}]
  %s2 = inlined_call_operand.hbm [shape: f32[32,32], index: 2, kind: input, shape index: {}]
  %s3 = inlined_call_operand.vmem [shape: f32[1,32], index: 3, kind: input, shape index: {}]
  %s4 = inlined_call_operand.hbm [shape: f32[32,128], index: 4, kind: input, shape index: {}]
  %s5 = inlined_call_operand.vmem [shape: f32[1,128], index: 5, kind: input, shape index: {}]
  %s6 = inlined_call_operand.hbm [shape: f32[32,32], index: 6, kind: input, shape index: {}]
  %s7 = inlined_call_operand.vmem [shape: f32[1,32], index: 7, kind: input, shape index: {}]
  %s8 = inlined_call_operand.hbm [shape: f32[32,128], index: 8, kind: input, shape index: {}]
  %s9 = inlined_call_operand.vmem [shape: f32[1,128], index: 9, kind: input, shape index: {}]
  %s10 = inlined_call_operand.hbm [shape: f32[16,128], index: 10, kind: output, shape index: {0}]
  %s11 = inlined_call_operand.hbm [shape: f32[16,128], index: 11, kind: output, shape index: {1}]
  %12 = xla_tuple %s10, %s11
  %s13 = sld [smem:[#allocation0]]
  $region105: #{tpu_custom_call.1} parent=0
    _
  %s15 = ssub.s32 1, %s13
  %s16 = scalar_select 0, %s15, %s13
  $region1: #{tpu_custom_call.1} parent=0
    #allocation2 [shape = 'u8[8192]{0}', space=vmem, size = 0x2000, scoped, tag = 'input window, operand 0']
    #allocation3 [shape = 's32[2]{0}', space=sflag, size = 0x8, scoped, tag = 'scoped memory for tpu_custom_call.1']
    #allocation4 [shape = 's32[2]{0}', space=sflag, size = 0x8, scoped, tag = 'scoped memory for tpu_custom_call.1']
    #allocation5 [shape = 'u8[8192]{0}', space=vmem, size = 0x2000, scoped, tag = 'input window, operand 1']
    #allocation6 [shape = 's32[2]{0}', space=sflag, size = 0x8, scoped, tag = 'scoped memory for tpu_custom_call.1']
    #allocation7 [shape = 'u8[16384]{0}', space=vmem, size = 0x4000, scoped, tag = 'input window, operand 2, single buffered']
    #allocation8 [shape = 'u8[16384]{0}', space=vmem, size = 0x4000, scoped, tag = 'input window, operand 4, single buffered']
    #allocation9 [shape = 's32[1]{0}', space=sflag, size = 0x4, scoped, tag = 'scoped memory for tpu_custom_call.1']
    #allocation10 [shape = 'u8[16384]{0}', space=vmem, size = 0x4000, scoped, tag = 'input window, operand 6, single buffered']
    #allocation11 [shape = 'u8[16384]{0}', space=vmem, size = 0x4000, scoped, tag = 'input window, operand 8, single buffered']
    #allocation12 [shape = 's32[1]{0}', space=sflag, size = 0x4, scoped, tag = 'scoped memory for tpu_custom_call.1']
    #allocation13 [shape = 'u8[8192]{0}', space=vmem, size = 0x2000, scoped, tag = 'output window, operand 0']
    #allocation14 [shape = 'u8[8192]{0}', space=vmem, size = 0x2000, scoped, tag = 'output window, operand 1']
    #allocation15 [shape = 's32[2]{0}', space=sflag, size = 0x8, scoped, tag = 'scoped memory for tpu_custom_call.1']
    %17 = vsyncpa [#allocation3], 0
    %s18 = scalar_lea.sflag [#allocation3], 1
    %19 = vsyncpa %s18, 0
    %20 = vsyncpa [#allocation6], 0
    %s21 = scalar_lea.sflag [#allocation6], 1
    %22 = vsyncpa %s21, 0
    %23 = vsyncpa [#allocation9], 0
    %24 = vsyncpa [#allocation12], 0
    %25 = vsyncpa [#allocation4], 0
    %s26 = scalar_lea.sflag [#allocation4], 1
    %27 = vsyncpa %s26, 0
    %28 = vsyncpa [#allocation15], 0
    %s29 = scalar_lea.sflag [#allocation15], 1
    %30 = vsyncpa %s29, 0
    loop: start=0, step=1, limit=4
    $region2: #{tpu_custom_call.1} parent=1 // loop_pre_header
      _
    $region3: #{tpu_custom_call.1} parent=1 // loop_header
      %s32 = sphi 0, %s36
      %p33 = scmp.ge.s32.totalorder %s32, 4
      %s42 = sphi 0, %s44
      %s45 = sphi 0, %s42
      %s46 = sphi 0, %s45
      %s62 = sphi 0, %s46
      %s68 = sphi 0, %s70
      %s71 = sphi 0, %s68
      %s72 = sphi 0, %s71
      %s88 = sphi 0, %s72
      %s92 = sphi 0, %s92
      %s94 = sphi 0, %s92
      %s95 = sphi 0, %s94
      %s109 = sphi 0, %s95
      %s113 = sphi 0, %s113
      %s115 = sphi 0, %s113
      %s116 = sphi 0, %s115
      %s130 = sphi 0, %s116
      %s134 = sphi 0, %s134
      %s136 = sphi 0, %s134
      %s137 = sphi 0, %s136
      %s151 = sphi 0, %s137
      %s155 = sphi 0, %s155
      %s157 = sphi 0, %s155
      %s158 = sphi 0, %s157
      %s172 = sphi 0, %s158
      %s176 = sphi 0, %s176
      %s178 = sphi 0, %s176
      %s179 = sphi 0, %s178
      %s193 = sphi 0, %s179
      %s197 = sphi 0, %s197
      %s199 = sphi 0, %s197
      %s200 = sphi 0, %s199
      %s214 = sphi 0, %s200
      %s218 = sphi 0, %s218
      %s220 = sphi 0, %s218
      %s221 = sphi 0, %s220
      %s235 = sphi 0, %s221
      %s239 = sphi 0, %s239
      %s241 = sphi 0, %s239
      %s242 = sphi 0, %s241
      %s256 = sphi 0, %s242
      %s262 = sphi 0, %s264
      %s265 = sphi 0, %s262
      %s266 = sphi 0, %s265
      %s282 = sphi 0, %s266
      %s288 = sphi 0, %s290
      %s291 = sphi 0, %s288
      %s292 = sphi 0, %s291
      %s308 = sphi 0, %s292
    $region4: #{tpu_custom_call.1} parent=1 // loop_header_branch
      %35 = sbr.rel (%p33) target = $region8
    $region5: #{tpu_custom_call.1} parent=1 // loop_body
      %s37 = ssub.s32 %s32, 1
      %s38 = ssub.s32 %s32, 2
      %s39 = sadd.s32 %s32, 1
      %s40 = ssub.s32 %s32, %s39
      %p41 = scmp.eq.s32.totalorder %s40, 0
      %s43 = sadd.s32 %s42, 1
      %s44 = scalar_select %p41, %s42, %s43
      %p47 = pneg %p41
      %p48 = scmp.eq.s32.totalorder %s32, 1
      %p49 = por %p47, %p48
      %p50 = scmp.ne.s32.totalorder %s42, %s45
      %p51 = scmp.eq.s32.totalorder %s32, 0
      %p52 = por %p50, %p51
      %p53 = scmp.ne.s32.totalorder %s42, %s45
      %p54 = scmp.eq.s32.totalorder %s37, 1
      %p55 = por %p53, %p54
      %p56 = scmp.ne.s32.totalorder %s45, %s46
      %p57 = scmp.eq.s32.totalorder %s37, 0
      %p58 = por %p56, %p57
      %p59 = scmp.ne.s32.totalorder %s45, %s46
      %p60 = scmp.eq.s32.totalorder %s38, 1
      %p61 = por %p59, %p60
      %p63 = scmp.ne.s32.totalorder %s46, %s62
      %p64 = scmp.eq.s32.totalorder %s38, 0
      %p65 = por %p63, %p64
      %s66 = ssub.s32 %s32, %s39
      %p67 = scmp.eq.s32.totalorder %s66, 0
      %s69 = sadd.s32 %s68, 1
      %s70 = scalar_select %p67, %s68, %s69
      %p73 = pneg %p67
      %p74 = scmp.eq.s32.totalorder %s32, 1
      %p75 = por %p73, %p74
      %p76 = scmp.ne.s32.totalorder %s68, %s71
      %p77 = scmp.eq.s32.totalorder %s32, 0
      %p78 = por %p76, %p77
      %p79 = scmp.ne.s32.totalorder %s68, %s71
      %p80 = scmp.eq.s32.totalorder %s37, 1
      %p81 = por %p79, %p80
      %p82 = scmp.ne.s32.totalorder %s71, %s72
      %p83 = scmp.eq.s32.totalorder %s37, 0
      %p84 = por %p82, %p83
      %p85 = scmp.ne.s32.totalorder %s71, %s72
      %p86 = scmp.eq.s32.totalorder %s38, 1
      %p87 = por %p85, %p86
      %p89 = scmp.ne.s32.totalorder %s72, %s88
      %p90 = scmp.eq.s32.totalorder %s38, 0
      %p91 = por %p89, %p90
      %s93 = sadd.s32 %s92, 1
      %p96 = scmp.eq.s32.totalorder %s32, 1
      %p97 = scmp.ne.s32.totalorder %s92, %s94
      %p98 = scmp.eq.s32.totalorder %s32, 0
      %p99 = por %p97, %p98
      %p100 = scmp.ne.s32.totalorder %s92, %s94
      %p101 = scmp.eq.s32.totalorder %s37, 1
      %p102 = por %p100, %p101
      %p103 = scmp.ne.s32.totalorder %s94, %s95
      %p104 = scmp.eq.s32.totalorder %s37, 0
      %p105 = por %p103, %p104
      %p106 = scmp.ne.s32.totalorder %s94, %s95
      %p107 = scmp.eq.s32.totalorder %s38, 1
      %p108 = por %p106, %p107
      %p110 = scmp.ne.s32.totalorder %s95, %s109
      %p111 = scmp.eq.s32.totalorder %s38, 0
      %p112 = por %p110, %p111
      %s114 = sadd.s32 %s113, 1
      %p117 = scmp.eq.s32.totalorder %s32, 1
      %p118 = scmp.ne.s32.totalorder %s113, %s115
      %p119 = scmp.eq.s32.totalorder %s32, 0
      %p120 = por %p118, %p119
      %p121 = scmp.ne.s32.totalorder %s113, %s115
      %p122 = scmp.eq.s32.totalorder %s37, 1
      %p123 = por %p121, %p122
      %p124 = scmp.ne.s32.totalorder %s115, %s116
      %p125 = scmp.eq.s32.totalorder %s37, 0
      %p126 = por %p124, %p125
      %p127 = scmp.ne.s32.totalorder %s115, %s116
      %p128 = scmp.eq.s32.totalorder %s38, 1
      %p129 = por %p127, %p128
      %p131 = scmp.ne.s32.totalorder %s116, %s130
      %p132 = scmp.eq.s32.totalorder %s38, 0
      %p133 = por %p131, %p132
      %s135 = sadd.s32 %s134, 1
      %p138 = scmp.eq.s32.totalorder %s32, 1
      %p139 = scmp.ne.s32.totalorder %s134, %s136
      %p140 = scmp.eq.s32.totalorder %s32, 0
      %p141 = por %p139, %p140
      %p142 = scmp.ne.s32.totalorder %s134, %s136
      %p143 = scmp.eq.s32.totalorder %s37, 1
      %p144 = por %p142, %p143
      %p145 = scmp.ne.s32.totalorder %s136, %s137
      %p146 = scmp.eq.s32.totalorder %s37, 0
      %p147 = por %p145, %p146
      %p148 = scmp.ne.s32.totalorder %s136, %s137
      %p149 = scmp.eq.s32.totalorder %s38, 1
      %p150 = por %p148, %p149
      %p152 = scmp.ne.s32.totalorder %s137, %s151
      %p153 = scmp.eq.s32.totalorder %s38, 0
      %p154 = por %p152, %p153
      %s156 = sadd.s32 %s155, 1
      %p159 = scmp.eq.s32.totalorder %s32, 1
      %p160 = scmp.ne.s32.totalorder %s155, %s157
      %p161 = scmp.eq.s32.totalorder %s32, 0
      %p162 = por %p160, %p161
      %p163 = scmp.ne.s32.totalorder %s155, %s157
      %p164 = scmp.eq.s32.totalorder %s37, 1
      %p165 = por %p163, %p164
      %p166 = scmp.ne.s32.totalorder %s157, %s158
      %p167 = scmp.eq.s32.totalorder %s37, 0
      %p168 = por %p166, %p167
      %p169 = scmp.ne.s32.totalorder %s157, %s158
      %p170 = scmp.eq.s32.totalorder %s38, 1
      %p171 = por %p169, %p170
      %p173 = scmp.ne.s32.totalorder %s158, %s172
      %p174 = scmp.eq.s32.totalorder %s38, 0
      %p175 = por %p173, %p174
      %s177 = sadd.s32 %s176, 1
      %p180 = scmp.eq.s32.totalorder %s32, 1
      %p181 = scmp.ne.s32.totalorder %s176, %s178
      %p182 = scmp.eq.s32.totalorder %s32, 0
      %p183 = por %p181, %p182
      %p184 = scmp.ne.s32.totalorder %s176, %s178
      %p185 = scmp.eq.s32.totalorder %s37, 1
      %p186 = por %p184, %p185
      %p187 = scmp.ne.s32.totalorder %s178, %s179
      %p188 = scmp.eq.s32.totalorder %s37, 0
      %p189 = por %p187, %p188
      %p190 = scmp.ne.s32.totalorder %s178, %s179
      %p191 = scmp.eq.s32.totalorder %s38, 1
      %p192 = por %p190, %p191
      %p194 = scmp.ne.s32.totalorder %s179, %s193
      %p195 = scmp.eq.s32.totalorder %s38, 0
      %p196 = por %p194, %p195
      %s198 = sadd.s32 %s197, 1
      %p201 = scmp.eq.s32.totalorder %s32, 1
      %p202 = scmp.ne.s32.totalorder %s197, %s199
      %p203 = scmp.eq.s32.totalorder %s32, 0
      %p204 = por %p202, %p203
      %p205 = scmp.ne.s32.totalorder %s197, %s199
      %p206 = scmp.eq.s32.totalorder %s37, 1
      %p207 = por %p205, %p206
      %p208 = scmp.ne.s32.totalorder %s199, %s200
      %p209 = scmp.eq.s32.totalorder %s37, 0
      %p210 = por %p208, %p209
      %p211 = scmp.ne.s32.totalorder %s199, %s200
      %p212 = scmp.eq.s32.totalorder %s38, 1
      %p213 = por %p211, %p212
      %p215 = scmp.ne.s32.totalorder %s200, %s214
      %p216 = scmp.eq.s32.totalorder %s38, 0
      %p217 = por %p215, %p216
      %s219 = sadd.s32 %s218, 1
      %p222 = scmp.eq.s32.totalorder %s32, 1
      %p223 = scmp.ne.s32.totalorder %s218, %s220
      %p224 = scmp.eq.s32.totalorder %s32, 0
      %p225 = por %p223, %p224
      %p226 = scmp.ne.s32.totalorder %s218, %s220
      %p227 = scmp.eq.s32.totalorder %s37, 1
      %p228 = por %p226, %p227
      %p229 = scmp.ne.s32.totalorder %s220, %s221
      %p230 = scmp.eq.s32.totalorder %s37, 0
      %p231 = por %p229, %p230
      %p232 = scmp.ne.s32.totalorder %s220, %s221
      %p233 = scmp.eq.s32.totalorder %s38, 1
      %p234 = por %p232, %p233
      %p236 = scmp.ne.s32.totalorder %s221, %s235
      %p237 = scmp.eq.s32.totalorder %s38, 0
      %p238 = por %p236, %p237
      %s240 = sadd.s32 %s239, 1
      %p243 = scmp.eq.s32.totalorder %s32, 1
      %p244 = scmp.ne.s32.totalorder %s239, %s241
      %p245 = scmp.eq.s32.totalorder %s32, 0
      %p246 = por %p244, %p245
      %p247 = scmp.ne.s32.totalorder %s239, %s241
      %p248 = scmp.eq.s32.totalorder %s37, 1
      %p249 = por %p247, %p248
      %p250 = scmp.ne.s32.totalorder %s241, %s242
      %p251 = scmp.eq.s32.totalorder %s37, 0
      %p252 = por %p250, %p251
      %p253 = scmp.ne.s32.totalorder %s241, %s242
      %p254 = scmp.eq.s32.totalorder %s38, 1
      %p255 = por %p253, %p254
      %p257 = scmp.ne.s32.totalorder %s242, %s256
      %p258 = scmp.eq.s32.totalorder %s38, 0
      %p259 = por %p257, %p258
      %s260 = ssub.s32 %s32, %s39
      %p261 = scmp.eq.s32.totalorder %s260, 0
      %s263 = sadd.s32 %s262, 1
      %s264 = scalar_select %p261, %s262, %s263
      %p267 = pneg %p261
      %p268 = scmp.eq.s32.totalorder %s32, 1
      %p269 = por %p267, %p268
      %p270 = scmp.ne.s32.totalorder %s262, %s265
      %p271 = scmp.eq.s32.totalorder %s32, 0
      %p272 = por %p270, %p271
      %p273 = scmp.ne.s32.totalorder %s262, %s265
      %p274 = scmp.eq.s32.totalorder %s37, 1
      %p275 = por %p273, %p274
      %p276 = scmp.ne.s32.totalorder %s265, %s266
      %p277 = scmp.eq.s32.totalorder %s37, 0
      %p278 = por %p276, %p277
      %p279 = scmp.ne.s32.totalorder %s265, %s266
      %p280 = scmp.eq.s32.totalorder %s38, 1
      %p281 = por %p279, %p280
      %p283 = scmp.ne.s32.totalorder %s266, %s282
      %p284 = scmp.eq.s32.totalorder %s38, 0
      %p285 = por %p283, %p284
      %s286 = ssub.s32 %s32, %s39
      %p287 = scmp.eq.s32.totalorder %s286, 0
      %s289 = sadd.s32 %s288, 1
      %s290 = scalar_select %p287, %s288, %s289
      %p293 = pneg %p287
      %p294 = scmp.eq.s32.totalorder %s32, 1
      %p295 = por %p293, %p294
      %p296 = scmp.ne.s32.totalorder %s288, %s291
      %p297 = scmp.eq.s32.totalorder %s32, 0
      %p298 = por %p296, %p297
      %p299 = scmp.ne.s32.totalorder %s288, %s291
      %p300 = scmp.eq.s32.totalorder %s37, 1
      %p301 = por %p299, %p300
      %p302 = scmp.ne.s32.totalorder %s291, %s292
      %p303 = scmp.eq.s32.totalorder %s37, 0
      %p304 = por %p302, %p303
      %p305 = scmp.ne.s32.totalorder %s291, %s292
      %p306 = scmp.eq.s32.totalorder %s38, 1
      %p307 = por %p305, %p306
      %p309 = scmp.ne.s32.totalorder %s292, %s308
      %p310 = scmp.eq.s32.totalorder %s38, 0
      %p311 = por %p309, %p310
      %p312 = scmp.le.s32.totalorder 1, %s32
      %p313 = scmp.lt.s32.totalorder %s32, 3
      %p314 = pnand %p312, %p313
      %p315 = pneg %p314
      // Predicated region
      $region9: #{tpu_custom_call.1} parent=5 // pred_check
        _
      $region10: #{tpu_custom_call.1} parent=5 // pred_check_branch
        %317 = sbr.rel (%p314) target = $region12
      $region11: #{tpu_custom_call.1} parent=5 // pred_region
        %s318 = ssub.s32 %s32, 1
        // Predicated region
        $region13: #{tpu_custom_call.1} parent=11 // pred_check
          %p319 = pneg %p105
        $region14: #{tpu_custom_call.1} parent=11 // pred_check_branch
          %321 = sbr.rel (%p319) target = $region16
        $region15: #{tpu_custom_call.1} parent=11 // pred_region
          %323 = vsyncadd [#allocation6], 0
          %s324 = sshll.u32 %s2, 4
          %s325 = int_to_ptr.hbm [resolvable:$true] %s324
          %s326 = sshll.u32 [#allocation7], 4
          %s327 = int_to_ptr.vmem [resolvable:$true] %s326
          %332 = dma.hbm_to_vmem [thread:$0]  %s325, 512, %s327, [#allocation6], 128, 128, 8
        $region16: #{tpu_custom_call.1} parent=11 // pred_fallthru
          _
        // Predicated region
        $region17: #{tpu_custom_call.1} parent=11 // pred_check
          %p333 = pneg %p126
        $region18: #{tpu_custom_call.1} parent=11 // pred_check_branch
          %335 = sbr.rel (%p333) target = $region20
        $region19: #{tpu_custom_call.1} parent=11 // pred_region
          _
        $region20: #{tpu_custom_call.1} parent=11 // pred_fallthru
          _
        // Predicated region
        $region21: #{tpu_custom_call.1} parent=11 // pred_check
          %p336 = pneg %p147
        $region22: #{tpu_custom_call.1} parent=11 // pred_check_branch
          %338 = sbr.rel (%p336) target = $region24
        $region23: #{tpu_custom_call.1} parent=11 // pred_region
          %340 = vsyncadd [#allocation9], 0
          %s341 = sshll.u32 %s4, 4
          %s342 = int_to_ptr.hbm [resolvable:$true] %s341
          %s343 = sshll.u32 [#allocation8], 4
          %s344 = int_to_ptr.vmem [resolvable:$true] %s343
          %349 = dma.hbm_to_vmem [thread:$0]  %s342, 512, %s344, [#allocation9], 128, 128, 8
        $region24: #{tpu_custom_call.1} parent=11 // pred_fallthru
          _
        // Predicated region
        $region25: #{tpu_custom_call.1} parent=11 // pred_check
          %p350 = pneg %p168
        $region26: #{tpu_custom_call.1} parent=11 // pred_check_branch
          %352 = sbr.rel (%p350) target = $region28
        $region27: #{tpu_custom_call.1} parent=11 // pred_region
          _
        $region28: #{tpu_custom_call.1} parent=11 // pred_fallthru
          _
        // Predicated region
        $region29: #{tpu_custom_call.1} parent=11 // pred_check
          %p353 = pneg %p189
        $region30: #{tpu_custom_call.1} parent=11 // pred_check_branch
          %355 = sbr.rel (%p353) target = $region32
        $region31: #{tpu_custom_call.1} parent=11 // pred_region
          %357 = vsyncadd [#allocation9], 0
          %s358 = sshll.u32 %s6, 4
          %s359 = int_to_ptr.hbm [resolvable:$true] %s358
          %s360 = sshll.u32 [#allocation10], 4
          %s361 = int_to_ptr.vmem [resolvable:$true] %s360
          %366 = dma.hbm_to_vmem [thread:$0]  %s359, 512, %s361, [#allocation9], 128, 128, 8
        $region32: #{tpu_custom_call.1} parent=11 // pred_fallthru
          _
        // Predicated region
        $region33: #{tpu_custom_call.1} parent=11 // pred_check
          %p367 = pneg %p210
        $region34: #{tpu_custom_call.1} parent=11 // pred_check_branch
          %369 = sbr.rel (%p367) target = $region36
        $region35: #{tpu_custom_call.1} parent=11 // pred_region
          _
        $region36: #{tpu_custom_call.1} parent=11 // pred_fallthru
          _
        // Predicated region
        $region37: #{tpu_custom_call.1} parent=11 // pred_check
          %p370 = pneg %p231
        $region38: #{tpu_custom_call.1} parent=11 // pred_check_branch
          %372 = sbr.rel (%p370) target = $region40
        $region39: #{tpu_custom_call.1} parent=11 // pred_region
          %374 = vsyncadd [#allocation12], 0
          %s375 = sshll.u32 %s8, 4
          %s376 = int_to_ptr.hbm [resolvable:$true] %s375
          %s377 = sshll.u32 [#allocation11], 4
          %s378 = int_to_ptr.vmem [resolvable:$true] %s377
          %383 = dma.hbm_to_vmem [thread:$0]  %s376, 512, %s378, [#allocation12], 128, 128, 8
        $region40: #{tpu_custom_call.1} parent=11 // pred_fallthru
          _
        // Predicated region
        $region41: #{tpu_custom_call.1} parent=11 // pred_check
          %p384 = pneg %p252
        $region42: #{tpu_custom_call.1} parent=11 // pred_check_branch
          %386 = sbr.rel (%p384) target = $region44
        $region43: #{tpu_custom_call.1} parent=11 // pred_region
          _
        $region44: #{tpu_custom_call.1} parent=11 // pred_fallthru
          _
      $region12: #{tpu_custom_call.1} parent=5 // pred_fallthru
        _
      %p387 = scmp.lt.s32.totalorder %s32, 2
      // Predicated region
      $region45: #{tpu_custom_call.1} parent=5 // pred_check
        %p388 = pneg %p387
      $region46: #{tpu_custom_call.1} parent=5 // pred_check_branch
        %390 = sbr.rel (%p388) target = $region48
      $region47: #{tpu_custom_call.1} parent=5 // pred_region
        // Predicated region
        $region49: #{tpu_custom_call.1} parent=47 // pred_check
          %p391 = pneg %p52
        $region50: #{tpu_custom_call.1} parent=47 // pred_check_branch
          %393 = sbr.rel (%p391) target = $region52
        $region51: #{tpu_custom_call.1} parent=47 // pred_region
          %s394 = sand.u32 %s42, 1
          %s395 = scalar_lea.sflag [#allocation3], %s394
          %s396 = sand.u32 %s42, 1
          %s397 = smul.addr %s396, 8
          %s398 = scalar_lea.vmem [#allocation2], %s397
          %400 = vsyncadd %s395, 0
          %s401 = smul.addr %s32, 8
          %s402 = scalar_lea.hbm %s0, %s401
          %s404 = sshll.u32 %s402, 4
          %s405 = int_to_ptr.hbm [resolvable:$true] %s404
          %s406 = sshll.u32 %s398, 4
          %s407 = int_to_ptr.vmem [resolvable:$true] %s406
          %409 = dma.hbm_to_vmem [thread:$0]  %s405, 128, %s407, %s395
        $region52: #{tpu_custom_call.1} parent=47 // pred_fallthru
          _
        // Predicated region
        $region53: #{tpu_custom_call.1} parent=47 // pred_check
          %p410 = pneg %p78
        $region54: #{tpu_custom_call.1} parent=47 // pred_check_branch
          %412 = sbr.rel (%p410) target = $region56
        $region55: #{tpu_custom_call.1} parent=47 // pred_region
          %s413 = sand.u32 %s32, 1
          %s414 = scalar_lea.sflag [#allocation6], %s413
          %s415 = sand.u32 %s68, 1
          %s416 = smul.addr %s415, 8
          %s417 = scalar_lea.vmem [#allocation5], %s416
          %419 = vsyncadd %s414, 0
          %s420 = smul.addr %s32, 8
          %s421 = scalar_lea.hbm %s1, %s420
          %s423 = sshll.u32 %s421, 4
          %s424 = int_to_ptr.hbm [resolvable:$true] %s423
          %s425 = sshll.u32 %s417, 4
          %s426 = int_to_ptr.vmem [resolvable:$true] %s425
          %428 = dma.hbm_to_vmem [thread:$0]  %s424, 128, %s426, %s414
        $region56: #{tpu_custom_call.1} parent=47 // pred_fallthru
          _
      $region48: #{tpu_custom_call.1} parent=5 // pred_fallthru
        _
      %p429 = scmp.le.s32.totalorder 1, %s32
      %p430 = scmp.lt.s32.totalorder %s32, 3
      %p431 = pnand %p429, %p430
      %p432 = pneg %p431
      // Predicated region
      $region57: #{tpu_custom_call.1} parent=5 // pred_check
        _
      $region58: #{tpu_custom_call.1} parent=5 // pred_check_branch
        %434 = sbr.rel (%p431) target = $region60
      $region59: #{tpu_custom_call.1} parent=5 // pred_region
        %s435 = ssub.s32 %s32, 1
        %s436 = sand.u32 %s45, 1
        %s437 = scalar_lea.sflag [#allocation3], %s436
        %s438 = sand.u32 %s45, 1
        %s439 = smul.addr %s438, 8
        %s440 = scalar_lea.vmem [#allocation2], %s439
        // Predicated region
        $region61: #{tpu_custom_call.1} parent=59 // pred_check
          %p441 = pneg %p58
        $region62: #{tpu_custom_call.1} parent=59 // pred_check_branch
          %443 = sbr.rel (%p441) target = $region64
        $region63: #{tpu_custom_call.1} parent=59 // pred_region
          %445 = dma.done %s437, 128
        $region64: #{tpu_custom_call.1} parent=59 // pred_fallthru
          _
        %s446 = sand.u32 %s37, 1
        %s447 = scalar_lea.sflag [#allocation6], %s446
        %s448 = sand.u32 %s71, 1
        %s449 = smul.addr %s448, 8
        %s450 = scalar_lea.vmem [#allocation5], %s449
        // Predicated region
        $region65: #{tpu_custom_call.1} parent=59 // pred_check
          %p451 = pneg %p84
        $region66: #{tpu_custom_call.1} parent=59 // pred_check_branch
          %453 = sbr.rel (%p451) target = $region68
        $region67: #{tpu_custom_call.1} parent=59 // pred_region
          %455 = dma.done %s447, 128
        $region68: #{tpu_custom_call.1} parent=59 // pred_fallthru
          _
        // Predicated region
        $region69: #{tpu_custom_call.1} parent=59 // pred_check
          %p456 = pneg %p105
        $region70: #{tpu_custom_call.1} parent=59 // pred_check_branch
          %458 = sbr.rel (%p456) target = $region72
        $region71: #{tpu_custom_call.1} parent=59 // pred_region
          %460 = dma.done [#allocation6], 512
        $region72: #{tpu_custom_call.1} parent=59 // pred_fallthru
          _
        // Predicated region
        $region73: #{tpu_custom_call.1} parent=59 // pred_check
          %p461 = pneg %p147
        $region74: #{tpu_custom_call.1} parent=59 // pred_check_branch
          %463 = sbr.rel (%p461) target = $region76
        $region75: #{tpu_custom_call.1} parent=59 // pred_region
          %465 = dma.done [#allocation9], 512
        $region76: #{tpu_custom_call.1} parent=59 // pred_fallthru
          _
        // Predicated region
        $region77: #{tpu_custom_call.1} parent=59 // pred_check
          %p466 = pneg %p189
        $region78: #{tpu_custom_call.1} parent=59 // pred_check_branch
          %468 = sbr.rel (%p466) target = $region80
        $region79: #{tpu_custom_call.1} parent=59 // pred_region
          %470 = dma.done [#allocation9], 512
        $region80: #{tpu_custom_call.1} parent=59 // pred_fallthru
          _
        // Predicated region
        $region81: #{tpu_custom_call.1} parent=59 // pred_check
          %p471 = pneg %p231
        $region82: #{tpu_custom_call.1} parent=59 // pred_check_branch
          %473 = sbr.rel (%p471) target = $region84
        $region83: #{tpu_custom_call.1} parent=59 // pred_region
          %475 = dma.done [#allocation12], 512
        $region84: #{tpu_custom_call.1} parent=59 // pred_fallthru
          _
        %s476 = sand.u32 %s45, 1
        %s477 = scalar_lea.sflag [#allocation3], %s476
        %s478 = sand.u32 %s45, 1
        %s479 = smul.addr %s478, 8
        %s480 = scalar_lea.vmem [#allocation2], %s479
        %p481 = pneg %p58
        %p482 = pneg %p55
        %s483 = sand.u32 %s37, 1
        %s484 = scalar_lea.sflag [#allocation6], %s483
        %s485 = sand.u32 %s71, 1
        %s486 = smul.addr %s485, 8
        %s487 = scalar_lea.vmem [#allocation5], %s486
        %p488 = pneg %p84
        %p489 = pneg %p81
        %p490 = pneg %p105
        %p491 = pneg %p102
        %p492 = pneg %p126
        %p493 = pneg %p123
        %p494 = pneg %p147
        %p495 = pneg %p144
        %p496 = pneg %p168
        %p497 = pneg %p165
        %p498 = pneg %p189
        %p499 = pneg %p186
        %p500 = pneg %p210
        %p501 = pneg %p207
        %p502 = pneg %p231
        %p503 = pneg %p228
        %p504 = pneg %p252
        %p505 = pneg %p249
        %p506 = pneg %p278
        %p507 = pneg %p275
        %s508 = sand.u32 %s265, 1
        %s509 = scalar_lea.sflag [#allocation4], %s508
        %s510 = sand.u32 %s265, 1
        %s511 = smul.addr %s510, 8
        %s512 = scalar_lea.vmem [#allocation13], %s511
        %p513 = pneg %p304
        %p514 = pneg %p301
        %s515 = sand.u32 %s291, 1
        %s516 = scalar_lea.sflag [#allocation15], %s515
        %s517 = sand.u32 %s291, 1
        %s518 = smul.addr %s517, 8
        %s519 = scalar_lea.vmem [#allocation14], %s518
        %v520 = vld [vmem:[%s440] sm:$0xff]
        %v521 = vld [vmem:[#allocation7] sm:$0xff]
        %v522 = vld [vmem:[#allocation7 + $0x8] sm:$0xff]
        %v523 = vld [vmem:[#allocation7 + $0x10] sm:$0xff]
        %v524 = vld [vmem:[#allocation7 + $0x18] sm:$0xff]
        %v525 = vld [vmem:[%s3] sm:$0x1]
        %v527 = vperm.slane %v525, 0
        %vm529 = vcmask 261120
        %v531 = vsel %vm529, %v520, 0
        %533 = vmatpush.msra.mxu0 0.0
        %534 = vmatpush.msra.mxu0 0.0
        %535 = vmatpush.msra.mxu0 0.0
        %536 = vmatpush.msra.mxu0 0.0
        %537 = vmatpush.msra.mxu0 0.0
        %538 = vmatpush.msra.mxu0 0.0
        %539 = vmatpush.msra.mxu0 0.0
        %540 = vmatpush.msra.mxu0 0.0
        %541 = vmatpush.msra.mxu0 0.0
        %542 = vmatpush.msra.mxu0 0.0
        %543 = vmatpush.msra.mxu0 0.0
        %544 = vmatpush.msra.mxu0 0.0
        %545 = vmatpush.msra.mxu0 %v524
        %546 = vmatpush.msra.mxu0 %v523
        %547 = vmatpush.msra.mxu0 %v522
        %548 = vmatpush.msra.mxu0 %v521
        %549 = vmatmul.f32.gmra.mxu0 %v531
        %v550 = vpop.f32.mrf.mxu0
        %v551 = vadd.f32 %v527, %v550
        %552 = vdwg.mxu0
        %v553 = vtanh.pop %v551
        %v554 = vld [vmem:[#allocation8] sm:$0xff]
        %v555 = vld [vmem:[#allocation8 + $0x8] sm:$0xff]
        %v556 = vld [vmem:[#allocation8 + $0x10] sm:$0xff]
        %v557 = vld [vmem:[#allocation8 + $0x18] sm:$0xff]
        %v558 = vld [vmem:[%s5] sm:$0x1]
        %v560 = vperm.slane %v558, 0
        %v563 = vsel %vm529, %v553, 0
        %565 = vmatpush.msra.mxu0 0.0
        %566 = vmatpush.msra.mxu0 0.0
        %567 = vmatpush.msra.mxu0 0.0
        %568 = vmatpush.msra.mxu0 0.0
        %569 = vmatpush.msra.mxu0 0.0
        %570 = vmatpush.msra.mxu0 0.0
        %571 = vmatpush.msra.mxu0 0.0
        %572 = vmatpush.msra.mxu0 0.0
        %573 = vmatpush.msra.mxu0 0.0
        %574 = vmatpush.msra.mxu0 0.0
        %575 = vmatpush.msra.mxu0 0.0
        %576 = vmatpush.msra.mxu0 0.0
        %577 = vmatpush.msra.mxu0 %v557
        %578 = vmatpush.msra.mxu0 %v556
        %579 = vmatpush.msra.mxu0 %v555
        %580 = vmatpush.msra.mxu0 %v554
        %581 = vmatmul.f32.gmra.mxu0 %v563
        %v582 = vpop.f32.mrf.mxu0
        %v583 = vadd.f32 %v560, %v582
        %584 = vdwg.mxu0
        %v585 = vlaneseq
        %v586 = vand.u32 %v585, 127
        %vm587 = vcmp.lt.s32.totalorder %v586, 5
        %v588 = vsel %vm587, %v583, -1e+30
        %589 = vmax.xlane.f32.xlu0 %v588
        %v590 = vpop.xlane.xlu0 %589
        %v591 = vsub.f32 %v588, %v590
        %v592 = vmul.f32 %v591, 1.442695
        %v593 = vpow.pop %v592
        %594 = vadd.xlane.f32.xlu0 %v593
        %v595 = vpop.xlane.xlu0 %594
        %v596 = vrcp.pop %v595
        %v597 = vmul.f32 %v595, %v596
        %v598 = vsub.f32 1.0, %v597
        %v599 = vmul.f32 %v596, %v598
        %v600 = vadd.f32 %v596, %v599
        %vm601 = vweird.f32 %v595
        %vm602 = vweird.f32 %v596
        %vm603 = vmor %vm601, %vm602
        %v604 = vsel %vm603, %v596, %v600
        %v605 = vand.u32 2147483647, %v595
        %vm606 = vcmp.eq.f32.partialorder %v605, 8.507059e+37
        %v607 = vand.u32 %v595, 2147483648
        %v608 = vor.u32 1.1754944e-38, %v607
        %v609 = vsel %vm606, %v608, %v604
        %v610 = vmul.f32 %v593, %v609
        %611 = vst [vmem:[%s512] sm:$0xff] %v610
        %v612 = vld [vmem:[%s450] sm:$0xff]
        %v613 = vld [vmem:[#allocation10] sm:$0xff]
        %v614 = vld [vmem:[#allocation10 + $0x8] sm:$0xff]
        %v615 = vld [vmem:[#allocation10 + $0x10] sm:$0xff]
        %v616 = vld [vmem:[#allocation10 + $0x18] sm:$0xff]
        %v617 = vld [vmem:[%s7] sm:$0x1]
        %v619 = vperm.slane %v617, 0
        %v622 = vsel %vm529, %v612, 0
        %624 = vmatpush.msra.mxu0 0.0
        %625 = vmatpush.msra.mxu0 0.0
        %626 = vmatpush.msra.mxu0 0.0
        %627 = vmatpush.msra.mxu0 0.0
        %628 = vmatpush.msra.mxu0 0.0
        %629 = vmatpush.msra.mxu0 0.0
        %630 = vmatpush.msra.mxu0 0.0
        %631 = vmatpush.msra.mxu0 0.0
        %632 = vmatpush.msra.mxu0 0.0
        %633 = vmatpush.msra.mxu0 0.0
        %634 = vmatpush.msra.mxu0 0.0
        %635 = vmatpush.msra.mxu0 0.0
        %636 = vmatpush.msra.mxu0 %v616
        %637 = vmatpush.msra.mxu0 %v615
        %638 = vmatpush.msra.mxu0 %v614
        %639 = vmatpush.msra.mxu0 %v613
        %640 = vmatmul.f32.gmra.mxu0 %v622
        %v641 = vpop.f32.mrf.mxu0
        %v642 = vadd.f32 %v619, %v641
        %643 = vdwg.mxu0
        %v644 = vtanh.pop %v642
        %v645 = vld [vmem:[#allocation11] sm:$0xff]
        %v646 = vld [vmem:[#allocation11 + $0x8] sm:$0xff]
        %v647 = vld [vmem:[#allocation11 + $0x10] sm:$0xff]
        %v648 = vld [vmem:[#allocation11 + $0x18] sm:$0xff]
        %v649 = vld [vmem:[%s9] sm:$0x1]
        %v651 = vperm.slane %v649, 0
        %v654 = vsel %vm529, %v644, 0
        %656 = vmatpush.msra.mxu0 0.0
        %657 = vmatpush.msra.mxu0 0.0
        %658 = vmatpush.msra.mxu0 0.0
        %659 = vmatpush.msra.mxu0 0.0
        %660 = vmatpush.msra.mxu0 0.0
        %661 = vmatpush.msra.mxu0 0.0
        %662 = vmatpush.msra.mxu0 0.0
        %663 = vmatpush.msra.mxu0 0.0
        %664 = vmatpush.msra.mxu0 0.0
        %665 = vmatpush.msra.mxu0 0.0
        %666 = vmatpush.msra.mxu0 0.0
        %667 = vmatpush.msra.mxu0 0.0
        %668 = vmatpush.msra.mxu0 %v648
        %669 = vmatpush.msra.mxu0 %v647
        %670 = vmatpush.msra.mxu0 %v646
        %671 = vmatpush.msra.mxu0 %v645
        %672 = vmatmul.f32.gmra.mxu0 %v654
        %v673 = vpop.f32.mrf.mxu0
        %v674 = vadd.f32 %v651, %v673
        %675 = vdwg.mxu0
        %vm676 = vcmp.lt.s32.totalorder %v586, 3
        %v677 = vsel %vm676, %v674, -1e+30
        %678 = vmax.xlane.f32.xlu0 %v677
        %v679 = vpop.xlane.xlu0 %678
        %v680 = vsub.f32 %v677, %v679
        %v681 = vmul.f32 %v680, 1.442695
        %v682 = vpow.pop %v681
        %683 = vadd.xlane.f32.xlu0 %v682
        %v684 = vpop.xlane.xlu0 %683
        %v685 = vrcp.pop %v684
        %v686 = vmul.f32 %v684, %v685
        %v687 = vsub.f32 1.0, %v686
        %v688 = vmul.f32 %v685, %v687
        %v689 = vadd.f32 %v685, %v688
        %vm690 = vweird.f32 %v684
        %vm691 = vweird.f32 %v685
        %vm692 = vmor %vm690, %vm691
        %v693 = vsel %vm692, %v685, %v689
        %v694 = vand.u32 2147483647, %v684
        %vm695 = vcmp.eq.f32.partialorder %v694, 8.507059e+37
        %v696 = vand.u32 %v684, 2147483648
        %v697 = vor.u32 1.1754944e-38, %v696
        %v698 = vsel %vm695, %v697, %v693
        %v699 = vmul.f32 %v682, %v698
        %700 = vst [vmem:[%s519] sm:$0xff] %v699
        %s701 = sand.u32 %s265, 1
        %s702 = scalar_lea.sflag [#allocation4], %s701
        %s703 = sand.u32 %s265, 1
        %s704 = smul.addr %s703, 8
        %s705 = scalar_lea.vmem [#allocation13], %s704
        %s706 = sand.u32 %s291, 1
        %s707 = scalar_lea.sflag [#allocation15], %s706
        %s708 = sand.u32 %s291, 1
        %s709 = smul.addr %s708, 8
        %s710 = scalar_lea.vmem [#allocation14], %s709
        // Predicated region
        $region85: #{tpu_custom_call.1} parent=59 // pred_check
          %p711 = pneg %p275
        $region86: #{tpu_custom_call.1} parent=59 // pred_check_branch
          %713 = sbr.rel (%p711) target = $region88
        $region87: #{tpu_custom_call.1} parent=59 // pred_region
          %715 = vsyncadd %s702, 0
          %s716 = smul.addr %s37, 8
          %s717 = scalar_lea.hbm %s10, %s716
          %s719 = sshll.u32 %s705, 4
          %s720 = int_to_ptr.vmem [resolvable:$true] %s719
          %s721 = sshll.u32 %s717, 4
          %s722 = int_to_ptr.hbm [resolvable:$true] %s721
          %724 = dma.vmem_to_hbm [thread:$0]  %s720, 128, %s722, %s702
        $region88: #{tpu_custom_call.1} parent=59 // pred_fallthru
          _
        // Predicated region
        $region89: #{tpu_custom_call.1} parent=59 // pred_check
          %p725 = pneg %p301
        $region90: #{tpu_custom_call.1} parent=59 // pred_check_branch
          %727 = sbr.rel (%p725) target = $region92
        $region91: #{tpu_custom_call.1} parent=59 // pred_region
          %729 = vsyncadd %s707, 0
          %s730 = smul.addr %s37, 8
          %s731 = scalar_lea.hbm %s11, %s730
          %s733 = sshll.u32 %s710, 4
          %s734 = int_to_ptr.vmem [resolvable:$true] %s733
          %s735 = sshll.u32 %s731, 4
          %s736 = int_to_ptr.hbm [resolvable:$true] %s735
          %738 = dma.vmem_to_hbm [thread:$0]  %s734, 128, %s736, %s707
        $region92: #{tpu_custom_call.1} parent=59 // pred_fallthru
          _
      $region60: #{tpu_custom_call.1} parent=5 // pred_fallthru
        _
      %p739 = scmp.le.s32.totalorder 2, %s32
      // Predicated region
      $region93: #{tpu_custom_call.1} parent=5 // pred_check
        %p740 = pneg %p739
      $region94: #{tpu_custom_call.1} parent=5 // pred_check_branch
        %742 = sbr.rel (%p740) target = $region96
      $region95: #{tpu_custom_call.1} parent=5 // pred_region
        %s743 = ssub.s32 %s32, 2
        // Predicated region
        $region97: #{tpu_custom_call.1} parent=95 // pred_check
          %p744 = pneg %p281
        $region98: #{tpu_custom_call.1} parent=95 // pred_check_branch
          %746 = sbr.rel (%p744) target = $region100
        $region99: #{tpu_custom_call.1} parent=95 // pred_region
          %s747 = sand.u32 %s266, 1
          %s748 = scalar_lea.sflag [#allocation4], %s747
          %s749 = sand.u32 %s266, 1
          %s750 = smul.addr %s749, 8
          %s751 = scalar_lea.vmem [#allocation13], %s750
          %753 = dma.done %s748, 128
        $region100: #{tpu_custom_call.1} parent=95 // pred_fallthru
          _
        // Predicated region
        $region101: #{tpu_custom_call.1} parent=95 // pred_check
          %p754 = pneg %p307
        $region102: #{tpu_custom_call.1} parent=95 // pred_check_branch
          %756 = sbr.rel (%p754) target = $region104
        $region103: #{tpu_custom_call.1} parent=95 // pred_region
          %s757 = sand.u32 %s292, 1
          %s758 = scalar_lea.sflag [#allocation15], %s757
          %s759 = sand.u32 %s292, 1
          %s760 = smul.addr %s759, 8
          %s761 = scalar_lea.vmem [#allocation14], %s760
          %763 = dma.done %s758, 128
        $region104: #{tpu_custom_call.1} parent=95 // pred_fallthru
          _
      $region96: #{tpu_custom_call.1} parent=5 // pred_fallthru
        _
    $region6: #{tpu_custom_call.1} parent=1 // loop_footer
      %s36 = sadd.s32 1, %s32
    $region7: #{tpu_custom_call.1} parent=1 // loop_footer_branch
      %31 = sbr.rel target = $region3
    $region8: #{tpu_custom_call.1} parent=1 // loop_exit
      _
    %764 = vsyncpa [#allocation3], 1
    %s765 = scalar_lea.sflag [#allocation3], 1
    %766 = vsyncpa %s765, 1
    %767 = vsyncpa [#allocation6], 1
    %s768 = scalar_lea.sflag [#allocation6], 1
    %769 = vsyncpa %s768, 1
    %770 = vsyncpa [#allocation9], 1
    %771 = vsyncpa [#allocation12], 1
    %772 = vsyncpa [#allocation4], 1
    %s773 = scalar_lea.sflag [#allocation4], 1
    %774 = vsyncpa %s773, 1
    %775 = vsyncpa [#allocation15], 1
    %s776 = scalar_lea.sflag [#allocation15], 1
    %777 = vsyncpa %s776, 1

</llo_original>
